<compile_context>
chip_gen: v7x
topology: tpu7x:2x2x1
jax: 0.10.0
libtpu: 0.0.40
codegen_flags: <defaults>
</compile_context>

<pallas_src>
import functools

import jax
import jax.numpy as jnp
from jax.experimental import pallas as pl
from jax.experimental.pallas import tpu as pltpu

MOTIF_LEN = 3        # K: motif length
ALPHABET = 4         # A, C, G, T
N_MOTIFS = 8         # number of motifs (len(motifs_and_anchors_aid) stand-in)
LANES = 128          # lane width of a vreg
DEFAULT_TILE_ROWS = 256   # up to 256*128 = 32768 positions / grid step (128 KiB int32)


def _phase1_kernel(n_motifs, codes_ref, mcode_ref, mprob_ref, out_ref):
    """codes_ref: (TILE_ROWS, 128) int32 packed k-mer codes (-1 = padding).
    mcode_ref:  (M,) int32 in SMEM   — packed motif codes.
    mprob_ref:  (M,) f32  in SMEM    — learned motifs_prob parameter.
    out_ref:    (TILE_ROWS, 128) f32 — unnormalized per-position targeting prob.
    """
    codes = codes_ref[...]                                   # (T, 128) int32
    acc = jnp.zeros(codes.shape, dtype=jnp.float32)
    # Static unroll over the (small) motif set: pure VPU compare + select.
    for m in range(n_motifs):
        acc = acc + jnp.where(codes == mcode_ref[m], mprob_ref[m], 0.0)
    out_ref[...] = acc


def phase1_forward(seq_ids, motif_ids, motifs_prob, *, max_tile_rows=DEFAULT_TILE_ROWS):
    """seq_ids: (L,) int32 in [0,4); motif_ids: (M, K) int32; motifs_prob: (M,) f32.

    Returns targeting_probs over the L-K+1 anchored positions (sums to 1).
    """
    L = int(seq_ids.shape[0])
    M, K = int(motif_ids.shape[0]), int(motif_ids.shape[1])
    n_pos = L - K + 1

    # ---- plain-JAX glue: pack each K-mer into a single int code ----------------
    codes = jnp.zeros((n_pos,), dtype=jnp.int32)
    for j in range(K):
        codes = codes + seq_ids[j:j + n_pos].astype(jnp.int32) * int(ALPHABET ** (K - 1 - j))

    powers = jnp.asarray([ALPHABET ** (K - 1 - j) for j in range(K)], dtype=jnp.int32)
    motif_codes = jnp.sum(motif_ids.astype(jnp.int32) * powers[None, :], axis=1)   # (M,)

    # ---- lane-dense (rows, 128) layout + position-axis tiling ------------------
    rows_needed = -(-n_pos // LANES)
    tile_rows = min(int(max_tile_rows), ((rows_needed + 7) // 8) * 8)
    n_tiles = -(-rows_needed // tile_rows)
    total_rows = n_tiles * tile_rows
    n_pad = total_rows * LANES

    codes_padded = jnp.full((n_pad,), -1, dtype=jnp.int32).at[:n_pos].set(codes)
    codes_2d = codes_padded.reshape(total_rows, LANES)

    unnorm = pl.pallas_call(
        functools.partial(_phase1_kernel, M),
        out_shape=jax.ShapeDtypeStruct((total_rows, LANES), jnp.float32),
        grid=(n_tiles,),
        in_specs=[
            pl.BlockSpec((tile_rows, LANES), lambda i: (i, 0)),
            pl.BlockSpec(memory_space=pltpu.MemorySpace.SMEM),   # motif codes
            pl.BlockSpec(memory_space=pltpu.MemorySpace.SMEM),   # motifs_prob
        ],
        out_specs=pl.BlockSpec((tile_rows, LANES), lambda i: (i, 0)),
        compiler_params=pltpu.CompilerParams(
            dimension_semantics=("parallel",)),
    )(codes_2d, motif_codes, motifs_prob.astype(jnp.float32))

    # ---- normalize() in the wrapper (keeps grid axis parallel; guards total==0) -
    probs = unnorm.reshape(-1)[:n_pos]
    total = jnp.maximum(jnp.sum(probs), jnp.float32(1e-30))
    return probs / total


def phase1_reference(seq_ids, motif_ids, motifs_prob):
    """Plain-JAX reference of the same exact-k-mer surrogate (for checking)."""
    L = int(seq_ids.shape[0])
    M, K = int(motif_ids.shape[0]), int(motif_ids.shape[1])
    n_pos = L - K + 1
    codes = jnp.zeros((n_pos,), dtype=jnp.int32)
    for j in range(K):
        codes = codes + seq_ids[j:j + n_pos].astype(jnp.int32) * int(ALPHABET ** (K - 1 - j))
    powers = jnp.asarray([ALPHABET ** (K - 1 - j) for j in range(K)], dtype=jnp.int32)
    mcodes = jnp.sum(motif_ids.astype(jnp.int32) * powers[None, :], axis=1)
    hits = (codes[:, None] == mcodes[None, :]).astype(jnp.float32)
    probs = hits @ motifs_prob.astype(jnp.float32)
    return probs / jnp.maximum(jnp.sum(probs), jnp.float32(1e-30))


if __name__ == "__main__":
    key = jax.random.PRNGKey(0)

    # ---- small deterministic example: L=66 bases -> 64 anchored positions ------
    L = 66
    seq_ids = jax.random.randint(key, (L,), 0, ALPHABET, dtype=jnp.int32)

    # motif set: K-mers taken from the sequence itself (so matches exist)
    offsets = [i * 8 for i in range(N_MOTIFS)]
    motif_ids = jnp.stack(
        [jax.lax.dynamic_slice(seq_ids, (o,), (MOTIF_LEN,)) for o in offsets], axis=0)

    # motifs_prob = normalize(ones(n_motifs)) exactly as in __init__
    motifs_prob = jnp.ones((N_MOTIFS,), dtype=jnp.float32) / N_MOTIFS

    targeting_probs = phase1_forward(seq_ids, motif_ids, motifs_prob)
    targeting_probs = jax.block_until_ready(targeting_probs)

    assert targeting_probs.shape == (L - MOTIF_LEN + 1,)
    assert bool(jnp.all(jnp.isfinite(targeting_probs)))
    assert abs(float(jnp.sum(targeting_probs)) - 1.0) < 1e-5
    ref = phase1_reference(seq_ids, motif_ids, motifs_prob)
    assert bool(jnp.allclose(targeting_probs, ref, rtol=1e-5, atol=1e-7))

    # ---- medium example exercising a multi-tile 'parallel' grid -----------------
    key2 = jax.random.PRNGKey(0)
    L2 = 2050                      # 2048 positions -> 16 rows -> 2 tiles of 8 rows
    seq_ids2 = jax.random.randint(key2, (L2,), 0, ALPHABET, dtype=jnp.int32)
    motif_ids2 = jnp.stack(
        [jax.lax.dynamic_slice(seq_ids2, (o,), (MOTIF_LEN,)) for o in offsets], axis=0)

    out2 = phase1_forward(seq_ids2, motif_ids2, motifs_prob, max_tile_rows=8)
    out2 = jax.block_until_ready(out2)
    ref2 = phase1_reference(seq_ids2, motif_ids2, motifs_prob)
    assert out2.shape == (L2 - MOTIF_LEN + 1,)
    assert abs(float(jnp.sum(out2)) - 1.0) < 1e-4
    assert bool(jnp.allclose(out2, ref2, rtol=1e-5, atol=1e-7))

    print("KERNEL_OK")
</pallas_src>

<mosaic_0001>
module attributes {stable_mosaic.version = 11 : i64} {
  func.func @_phase1_kernel(%arg0: i32, %arg1: memref<8x128xi32, #tpu.memory_space<vmem>>, %arg2: memref<8xi32, #tpu.memory_space<smem>>, %arg3: memref<8xf32, #tpu.memory_space<smem>>, %arg4: memref<8x128xf32, #tpu.memory_space<vmem>>) attributes {dimension_semantics = [#tpu.dimension_semantics<parallel>], iteration_bounds = array<i64: 1>, scalar_prefetch = 0 : i64, scratch_operands = 0 : i64, tpu.core_type = #tpu.core_type<tc>, window_params = [{transform_indices = @transform_0, window_bounds = array<i64: 8, 128>}, {transform_indices = @transform_1, window_bounds = array<i64: 8>}, {transform_indices = @transform_2, window_bounds = array<i64: 8>}, {transform_indices = @transform_3, window_bounds = array<i64: 8, 128>}]} {
    %c0 = arith.constant 0 : index
    %c0_0 = arith.constant 0 : index
    %0 = vector.load %arg1[%c0, %c0_0] : memref<8x128xi32, #tpu.memory_space<vmem>>, vector<8x128xi32>
    %cst = arith.constant 0.000000e+00 : f32
    %1 = vector.broadcast %cst : f32 to vector<8x128xf32>
    %c0_1 = arith.constant 0 : index
    %2 = memref.load %arg2[%c0_1] : memref<8xi32, #tpu.memory_space<smem>>
    %3 = vector.broadcast %2 : i32 to vector<8x128xi32>
    %4 = arith.cmpi eq, %0, %3 : vector<8x128xi32>
    %c0_2 = arith.constant 0 : index
    %5 = memref.load %arg3[%c0_2] : memref<8xf32, #tpu.memory_space<smem>>
    %cst_3 = arith.constant 0.000000e+00 : f32
    %6 = vector.broadcast %5 : f32 to vector<8x128xf32>
    %7 = vector.broadcast %cst_3 : f32 to vector<8x128xf32>
    %8 = arith.select %4, %6, %7 : vector<8x128xi1>, vector<8x128xf32>
    %9 = arith.addf %1, %8 : vector<8x128xf32>
    %c1 = arith.constant 1 : index
    %10 = memref.load %arg2[%c1] : memref<8xi32, #tpu.memory_space<smem>>
    %11 = vector.broadcast %10 : i32 to vector<8x128xi32>
    %12 = arith.cmpi eq, %0, %11 : vector<8x128xi32>
    %c1_4 = arith.constant 1 : index
    %13 = memref.load %arg3[%c1_4] : memref<8xf32, #tpu.memory_space<smem>>
    %cst_5 = arith.constant 0.000000e+00 : f32
    %14 = vector.broadcast %13 : f32 to vector<8x128xf32>
    %15 = vector.broadcast %cst_5 : f32 to vector<8x128xf32>
    %16 = arith.select %12, %14, %15 : vector<8x128xi1>, vector<8x128xf32>
    %17 = arith.addf %9, %16 : vector<8x128xf32>
    %c2 = arith.constant 2 : index
    %18 = memref.load %arg2[%c2] : memref<8xi32, #tpu.memory_space<smem>>
    %19 = vector.broadcast %18 : i32 to vector<8x128xi32>
    %20 = arith.cmpi eq, %0, %19 : vector<8x128xi32>
    %c2_6 = arith.constant 2 : index
    %21 = memref.load %arg3[%c2_6] : memref<8xf32, #tpu.memory_space<smem>>
    %cst_7 = arith.constant 0.000000e+00 : f32
    %22 = vector.broadcast %21 : f32 to vector<8x128xf32>
    %23 = vector.broadcast %cst_7 : f32 to vector<8x128xf32>
    %24 = arith.select %20, %22, %23 : vector<8x128xi1>, vector<8x128xf32>
    %25 = arith.addf %17, %24 : vector<8x128xf32>
    %c3 = arith.constant 3 : index
    %26 = memref.load %arg2[%c3] : memref<8xi32, #tpu.memory_space<smem>>
    %27 = vector.broadcast %26 : i32 to vector<8x128xi32>
    %28 = arith.cmpi eq, %0, %27 : vector<8x128xi32>
    %c3_8 = arith.constant 3 : index
    %29 = memref.load %arg3[%c3_8] : memref<8xf32, #tpu.memory_space<smem>>
    %cst_9 = arith.constant 0.000000e+00 : f32
    %30 = vector.broadcast %29 : f32 to vector<8x128xf32>
    %31 = vector.broadcast %cst_9 : f32 to vector<8x128xf32>
    %32 = arith.select %28, %30, %31 : vector<8x128xi1>, vector<8x128xf32>
    %33 = arith.addf %25, %32 : vector<8x128xf32>
    %c4 = arith.constant 4 : index
    %34 = memref.load %arg2[%c4] : memref<8xi32, #tpu.memory_space<smem>>
    %35 = vector.broadcast %34 : i32 to vector<8x128xi32>
    %36 = arith.cmpi eq, %0, %35 : vector<8x128xi32>
    %c4_10 = arith.constant 4 : index
    %37 = memref.load %arg3[%c4_10] : memref<8xf32, #tpu.memory_space<smem>>
    %cst_11 = arith.constant 0.000000e+00 : f32
    %38 = vector.broadcast %37 : f32 to vector<8x128xf32>
    %39 = vector.broadcast %cst_11 : f32 to vector<8x128xf32>
    %40 = arith.select %36, %38, %39 : vector<8x128xi1>, vector<8x128xf32>
    %41 = arith.addf %33, %40 : vector<8x128xf32>
    %c5 = arith.constant 5 : index
    %42 = memref.load %arg2[%c5] : memref<8xi32, #tpu.memory_space<smem>>
    %43 = vector.broadcast %42 : i32 to vector<8x128xi32>
    %44 = arith.cmpi eq, %0, %43 : vector<8x128xi32>
    %c5_12 = arith.constant 5 : index
    %45 = memref.load %arg3[%c5_12] : memref<8xf32, #tpu.memory_space<smem>>
    %cst_13 = arith.constant 0.000000e+00 : f32
    %46 = vector.broadcast %45 : f32 to vector<8x128xf32>
    %47 = vector.broadcast %cst_13 : f32 to vector<8x128xf32>
    %48 = arith.select %44, %46, %47 : vector<8x128xi1>, vector<8x128xf32>
    %49 = arith.addf %41, %48 : vector<8x128xf32>
    %c6 = arith.constant 6 : index
    %50 = memref.load %arg2[%c6] : memref<8xi32, #tpu.memory_space<smem>>
    %51 = vector.broadcast %50 : i32 to vector<8x128xi32>
    %52 = arith.cmpi eq, %0, %51 : vector<8x128xi32>
    %c6_14 = arith.constant 6 : index
    %53 = memref.load %arg3[%c6_14] : memref<8xf32, #tpu.memory_space<smem>>
    %cst_15 = arith.constant 0.000000e+00 : f32
    %54 = vector.broadcast %53 : f32 to vector<8x128xf32>
    %55 = vector.broadcast %cst_15 : f32 to vector<8x128xf32>
    %56 = arith.select %52, %54, %55 : vector<8x128xi1>, vector<8x128xf32>
    %57 = arith.addf %49, %56 : vector<8x128xf32>
    %c7 = arith.constant 7 : index
    %58 = memref.load %arg2[%c7] : memref<8xi32, #tpu.memory_space<smem>>
    %59 = vector.broadcast %58 : i32 to vector<8x128xi32>
    %60 = arith.cmpi eq, %0, %59 : vector<8x128xi32>
    %c7_16 = arith.constant 7 : index
    %61 = memref.load %arg3[%c7_16] : memref<8xf32, #tpu.memory_space<smem>>
    %cst_17 = arith.constant 0.000000e+00 : f32
    %62 = vector.broadcast %61 : f32 to vector<8x128xf32>
    %63 = vector.broadcast %cst_17 : f32 to vector<8x128xf32>
    %64 = arith.select %60, %62, %63 : vector<8x128xi1>, vector<8x128xf32>
    %65 = arith.addf %57, %64 : vector<8x128xf32>
    %c0_18 = arith.constant 0 : index
    %c0_19 = arith.constant 0 : index
    %66 = vector.load %arg4[%c0_18, %c0_19] : memref<8x128xf32, #tpu.memory_space<vmem>>, vector<8x128xf32>
    tpu.vector_store %arg4[%c0_18, %c0_19], %65 {strides = array<i32>} : memref<8x128xf32, #tpu.memory_space<vmem>>, vector<8x128xf32>,
    return
  }
  func.func @transform_0(%arg0: i32) -> (i32, i32) {
    %c0_i32 = arith.constant 0 : i32
    %c0_i32_0 = arith.constant 0 : i32
    return %arg0, %c0_i32 : i32, i32
  }
  func.func @transform_1(%arg0: i32) -> i32 {
    %c0_i32 = arith.constant 0 : i32
    %c0_i32_0 = arith.constant 0 : i32
    return %c0_i32 : i32
  }
  func.func @transform_2(%arg0: i32) -> i32 {
    %c0_i32 = arith.constant 0 : i32
    %c0_i32_0 = arith.constant 0 : i32
    return %c0_i32 : i32
  }
  func.func @transform_3(%arg0: i32) -> (i32, i32) {
    %c0_i32 = arith.constant 0 : i32
    %c0_i32_0 = arith.constant 0 : i32
    return %arg0, %c0_i32 : i32, i32
  }
}

</mosaic_0001>

<llo_original>
// kernel: tpu_custom_call.1
$region0: #{tpu_custom_call.1}
  #allocation0 [shape = 'u32[]', space=smem, size = 0x4, offset = 0x4, fixed_abs, tag = 'smem constant byte address 0x4 - core index']
  #allocation1 [shape = 'u32[144,128]{1,0:T(1,128)}', space=vmem, size = 0x12000, scoped, tag = 'internal scratch']
  %s0 = inlined_call_operand.hbm [shape: s32[8,128], index: 0, kind: input, shape index: {}]
  %s1 = inlined_call_operand.vmem [shape: s32[8], index: 1, kind: input, shape index: {}]
  %s2 = inlined_call_operand.vmem [shape: f32[8], index: 2, kind: input, shape index: {}]
  %s3 = inlined_call_operand.hbm [shape: f32[8,128], index: 3, kind: output, shape index: {}]
  %s4 = sld [smem:[#allocation0]]
  $region34: #{tpu_custom_call.1} parent=0
    _
  %s6 = ssub.s32 1, %s4
  %s7 = scalar_select 0, %s6, %s4
  $region1: #{tpu_custom_call.1} parent=0
    #allocation2 [shape = 'u8[4096]{0}', space=vmem, size = 0x1000, scoped, tag = 'input window, operand 0, single buffered']
    #allocation3 [shape = 's32[1]{0}', space=sflag, size = 0x4, scoped, tag = 'scoped memory for tpu_custom_call.1']
    #allocation4 [shape = 's32[1]{0}', space=sflag, size = 0x4, scoped, tag = 'scoped memory for tpu_custom_call.1']
    #allocation5 [shape = 's32[1]{0}', space=sflag, size = 0x4, scoped, tag = 'scoped memory for tpu_custom_call.1']
    #allocation6 [shape = 'u8[512]{0}', space=smem, size = 0x200, scoped, tag = 'input window, operand 1, single buffered']
    #allocation7 [shape = 'u8[512]{0}', space=smem, size = 0x200, scoped, tag = 'input window, operand 2, single buffered']
    #allocation8 [shape = 's32[1]{0}', space=sflag, size = 0x4, scoped, tag = 'scoped memory for tpu_custom_call.1']
    #allocation9 [shape = 'u8[4096]{0}', space=vmem, size = 0x1000, scoped, tag = 'output window, operand 0, single buffered']
    %8 = vsyncpa [#allocation3], 0
    %9 = vsyncpa [#allocation5], 0
    %10 = vsyncpa [#allocation8], 0
    %11 = vsyncpa [#allocation4], 0
    // Predicated region
    $region2: #{tpu_custom_call.1} parent=1 // pred_check
      _
    $region3: #{tpu_custom_call.1} parent=1 // pred_check_branch
      %13 = sbr.rel (0) target = $region5
    $region4: #{tpu_custom_call.1} parent=1 // pred_region
      %s15 = ssub.s32 128, 128
      %16 = vsyncadd [#allocation3], %s15
      %s18 = sshll.u32 [#allocation2], 4
      %s19 = int_to_ptr.vmem [resolvable:$true] %s18
      %21 = dma.hbm_to_vmem [thread:$0]  %s0, 128, %s19, [#allocation3]
    $region5: #{tpu_custom_call.1} parent=1 // pred_fallthru
      _
    // Predicated region
    $region6: #{tpu_custom_call.1} parent=1 // pred_check
      _
    $region7: #{tpu_custom_call.1} parent=1 // pred_check_branch
      %23 = sbr.rel (0) target = $region9
    $region8: #{tpu_custom_call.1} parent=1 // pred_region
      %s25 = ssub.s32 16, 16
      %26 = vsyncadd [#allocation5], %s25
      %s28 = sshll.u32 %s1, 4
      %s29 = int_to_ptr.vmem [resolvable:$true] %s28
      %31 = dma.vmem_to_smem %s29, 16, [#allocation6], [#allocation5]
    $region9: #{tpu_custom_call.1} parent=1 // pred_fallthru
      _
    // Predicated region
    $region10: #{tpu_custom_call.1} parent=1 // pred_check
      _
    $region11: #{tpu_custom_call.1} parent=1 // pred_check_branch
      %33 = sbr.rel (0) target = $region13
    $region12: #{tpu_custom_call.1} parent=1 // pred_region
      %s35 = ssub.s32 16, 16
      %36 = vsyncadd [#allocation8], %s35
      %s38 = sshll.u32 %s2, 4
      %s39 = int_to_ptr.vmem [resolvable:$true] %s38
      %41 = dma.vmem_to_smem %s39, 16, [#allocation7], [#allocation8]
    $region13: #{tpu_custom_call.1} parent=1 // pred_fallthru
      _
    // Predicated region
    $region14: #{tpu_custom_call.1} parent=1 // pred_check
      _
    $region15: #{tpu_custom_call.1} parent=1 // pred_check_branch
      %43 = sbr.rel (0) target = $region17
    $region16: #{tpu_custom_call.1} parent=1 // pred_region
      %44 = dma.done [#allocation3], 128
    $region17: #{tpu_custom_call.1} parent=1 // pred_fallthru
      _
    // Predicated region
    $region18: #{tpu_custom_call.1} parent=1 // pred_check
      _
    $region19: #{tpu_custom_call.1} parent=1 // pred_check_branch
      %46 = sbr.rel (0) target = $region21
    $region20: #{tpu_custom_call.1} parent=1 // pred_region
      %47 = dma.done [#allocation5], 16
    $region21: #{tpu_custom_call.1} parent=1 // pred_fallthru
      _
    // Predicated region
    $region22: #{tpu_custom_call.1} parent=1 // pred_check
      _
    $region23: #{tpu_custom_call.1} parent=1 // pred_check_branch
      %49 = sbr.rel (0) target = $region25
    $region24: #{tpu_custom_call.1} parent=1 // pred_region
      %50 = dma.done [#allocation8], 16
    $region25: #{tpu_custom_call.1} parent=1 // pred_fallthru
      _
    %51 = sfence
    %v52 = vld [vmem:[#allocation2] sm:$0xff]
    %s53 = sld [smem:[#allocation6]]
    %v54 = vstv %s53
    %vm55 = vcmp.eq.s32.totalorder %v52, %v54
    %s56 = sld [smem:[#allocation7]]
    %v57 = vstv %s56
    %v58 = vsel %vm55, %v57, 0.0
    %v59 = vadd.f32 %v58, 0.0
    %s60 = sld [smem:[#allocation6 + $0x1]]
    %v61 = vstv %s60
    %vm62 = vcmp.eq.s32.totalorder %v52, %v61
    %s63 = sld [smem:[#allocation7 + $0x1]]
    %v64 = vstv %s63
    %v65 = vsel %vm62, %v64, 0.0
    %v66 = vadd.f32 %v59, %v65
    %s67 = sld [smem:[#allocation6 + $0x2]]
    %v68 = vstv %s67
    %vm69 = vcmp.eq.s32.totalorder %v52, %v68
    %s70 = sld [smem:[#allocation7 + $0x2]]
    %v71 = vstv %s70
    %v72 = vsel %vm69, %v71, 0.0
    %v73 = vadd.f32 %v66, %v72
    %s74 = sld [smem:[#allocation6 + $0x3]]
    %v75 = vstv %s74
    %vm76 = vcmp.eq.s32.totalorder %v52, %v75
    %s77 = sld [smem:[#allocation7 + $0x3]]
    %v78 = vstv %s77
    %v79 = vsel %vm76, %v78, 0.0
    %v80 = vadd.f32 %v73, %v79
    %s81 = sld [smem:[#allocation6 + $0x4]]
    %v82 = vstv %s81
    %vm83 = vcmp.eq.s32.totalorder %v52, %v82
    %s84 = sld [smem:[#allocation7 + $0x4]]
    %v85 = vstv %s84
    %v86 = vsel %vm83, %v85, 0.0
    %v87 = vadd.f32 %v80, %v86
    %s88 = sld [smem:[#allocation6 + $0x5]]
    %v89 = vstv %s88
    %vm90 = vcmp.eq.s32.totalorder %v52, %v89
    %s91 = sld [smem:[#allocation7 + $0x5]]
    %v92 = vstv %s91
    %v93 = vsel %vm90, %v92, 0.0
    %v94 = vadd.f32 %v87, %v93
    %s95 = sld [smem:[#allocation6 + $0x6]]
    %v96 = vstv %s95
    %vm97 = vcmp.eq.s32.totalorder %v52, %v96
    %s98 = sld [smem:[#allocation7 + $0x6]]
    %v99 = vstv %s98
    %v100 = vsel %vm97, %v99, 0.0
    %v101 = vadd.f32 %v94, %v100
    %s102 = sld [smem:[#allocation6 + $0x7]]
    %v103 = vstv %s102
    %vm104 = vcmp.eq.s32.totalorder %v52, %v103
    %s105 = sld [smem:[#allocation7 + $0x7]]
    %v106 = vstv %s105
    %v107 = vsel %vm104, %v106, 0.0
    %v108 = vadd.f32 %v101, %v107
    %109 = vst [vmem:[#allocation9] sm:$0xff] %v108
    // Predicated region
    $region26: #{tpu_custom_call.1} parent=1 // pred_check
      _
    $region27: #{tpu_custom_call.1} parent=1 // pred_check_branch
      %111 = sbr.rel (0) target = $region29
    $region28: #{tpu_custom_call.1} parent=1 // pred_region
      %s113 = ssub.s32 128, 128
      %114 = vsyncadd [#allocation4], %s113
      %s116 = sshll.u32 [#allocation9], 4
      %s117 = int_to_ptr.vmem [resolvable:$true] %s116
      %119 = dma.vmem_to_hbm [thread:$0]  %s117, 128, %s3, [#allocation4]
    $region29: #{tpu_custom_call.1} parent=1 // pred_fallthru
      _
    // Predicated region
    $region30: #{tpu_custom_call.1} parent=1 // pred_check
      _
    $region31: #{tpu_custom_call.1} parent=1 // pred_check_branch
      %121 = sbr.rel (0) target = $region33
    $region32: #{tpu_custom_call.1} parent=1 // pred_region
      %122 = dma.done [#allocation4], 128
    $region33: #{tpu_custom_call.1} parent=1 // pred_fallthru
      _
    %123 = vsyncpa [#allocation3], 1
    %124 = vsyncpa [#allocation4], 1
    %125 = vsyncpa [#allocation5], 1
    %126 = vsyncpa [#allocation8], 1

</llo_original>
